<compile_context>
chip_gen: v6e
topology: v6e:2x2x1
jax: 0.10.0
libtpu: 0.0.40
codegen_flags: <defaults>
</compile_context>

<pallas_src>
import functools

import jax
import jax.numpy as jnp
from jax.experimental import pallas as pl
from jax.experimental.pallas import tpu as pltpu


def _ala_loss_kernel(logits_ref, labels_ref, qf_ref, out_ref, *, s, true_b, tb):
    i = pl.program_id(0)

    logits = logits_ref[...].astype(jnp.float32)      # (TB, C) f32 (upcast in-kernel)
    labels = labels_ref[...]                          # (TB, 1) i32
    qf = qf_ref[...].astype(jnp.float32)              # (1, C)  f32
    TB, C = logits.shape

    # Mask rows beyond the true batch size (last, possibly padded, tile).
    row_ids = i * tb + jax.lax.broadcasted_iota(jnp.int32, (TB, 1), 0)
    valid = row_ids < true_b                          # (TB, 1) bool
    logits = jnp.where(valid, logits, 0.0)            # keep padded rows finite

    # One-hot mask replaces torch.gather (row r, column labels[r]).
    col_ids = jax.lax.broadcasted_iota(jnp.int32, (TB, C), 1)
    onehot = (col_ids == labels).astype(jnp.float32)  # (TB, C)

    # Fused gather: s * adjusted_logit_y
    #   = sum_j onehot * ( s*logits - s*0.5*(1 - logits)*qf )
    s_adj = jnp.sum(
        onehot * (s * logits - (0.5 * s) * (1.0 - logits) * qf),
        axis=1, keepdims=True)                        # (TB, 1)

    # Numerically-stable logsumexp of s*logits over classes.
    z = s * logits
    z_max = jnp.max(z, axis=1, keepdims=True)
    lse = z_max + jnp.log(jnp.sum(jnp.exp(z - z_max), axis=1, keepdims=True))

    per_sample = lse - s_adj                          # == -log(num/den), (TB, 1)
    per_sample = jnp.where(valid, per_sample, 0.0)

    out_ref[0, 0] = jnp.sum(per_sample)               # per-tile partial sum


def _choose_tb(B, C, itemsize):
    """Largest batch tile whose double-buffered logits fit well under the
    v7x scoped-VMEM budget (safe on v5e/v6e too)."""
    budget = 12 * 1024 * 1024                         # ~12 MiB for 2x logits tiles
    tb = min(512, max(8, budget // max(1, 2 * C * itemsize)))
    tb = max(8, (tb // 8) * 8)                        # (8, 128) sublane constraint
    if tb >= B:
        return B                                      # one tile covers whole batch
    return tb


def ala_loss(logits, labels, qf, s=30.0):
    """logits: (B, C), labels: (B,) int, qf: (C,) -> scalar f32 loss."""
    B, C = logits.shape
    labels2d = labels.reshape(B, 1).astype(jnp.int32)
    qf2d = qf.reshape(1, C)

    tb = _choose_tb(B, C, jnp.dtype(logits.dtype).itemsize)
    num_tiles = pl.cdiv(B, tb)

    # TODO(synk): for vocab-scale C add an inner "arbitrary" class axis with a
    # running (flash-style) logsumexp so a single (TB, C) tile never exceeds VMEM.

    partials = pl.pallas_call(
        functools.partial(_ala_loss_kernel, s=float(s), true_b=B, tb=tb),
        out_shape=jax.ShapeDtypeStruct((num_tiles, 1), jnp.float32),
        grid_spec=pltpu.PrefetchScalarGridSpec(
            num_scalar_prefetch=0,
            grid=(num_tiles,),
            in_specs=[
                pl.BlockSpec((tb, C), lambda i: (i, 0)),   # logits tile (native dtype)
                pl.BlockSpec((tb, 1), lambda i: (i, 0)),   # labels tile
                pl.BlockSpec((1, C), lambda i: (0, 0)),    # qf, resident
            ],
            out_specs=pl.BlockSpec((1, 1), lambda i: (i, 0),
                                   memory_space=pltpu.SMEM),
        ),
        compiler_params=pltpu.CompilerParams(
            dimension_semantics=("parallel",),
        ),
    )(logits, labels2d, qf2d)

    return jnp.sum(partials) / B                      # mean over the TRUE batch size


def _ala_loss_ref(logits, labels, qf, s=30.0):
    """Pure-JAX reference mirroring the PyTorch code line-by-line."""
    logits = logits.astype(jnp.float32)
    qf = qf.astype(jnp.float32)
    logit_y = jnp.take_along_axis(logits, labels[:, None], axis=1)[:, 0]
    df = (1.0 - logit_y) / 2.0
    aala_y = df * qf[labels]
    adjusted = logit_y - aala_y
    num = jnp.exp(s * adjusted)
    den = jnp.sum(jnp.exp(s * logits), axis=1)
    return jnp.mean(-jnp.log(num / den))


if __name__ == "__main__":
    key = jax.random.PRNGKey(0)
    k1, k2, k3 = jax.random.split(key, 3)

    B, C = 8, 16
    # logits are interpreted as normalized cos(theta) values -> keep in [-1, 1]
    logits = jax.random.uniform(k1, (B, C), jnp.float32, minval=-1.0, maxval=1.0)
    labels = jax.random.randint(k2, (B,), 0, C, dtype=jnp.int32)
    qf = jax.random.uniform(k3, (C,), jnp.float32, minval=0.0, maxval=1.0)

    loss = ala_loss(logits, labels, qf, s=30.0)
    loss = jax.block_until_ready(loss)

    ref = _ala_loss_ref(logits, labels, qf, s=30.0)
    assert jnp.allclose(loss, ref, rtol=1e-5, atol=1e-5), (loss, ref)

    # Also exercise a batch that is not a multiple of the tile (padding mask path)
    # and a bf16 input (no wrapper-side upcast, kernel handles the cast).
    B2, C2 = 37, 256
    l2 = jax.random.uniform(k1, (B2, C2), jnp.float32, minval=-1.0, maxval=1.0)
    y2 = jax.random.randint(k2, (B2,), 0, C2, dtype=jnp.int32)
    q2 = jax.random.uniform(k3, (C2,), jnp.float32, minval=0.0, maxval=1.0)
    out_bf16 = jax.block_until_ready(
        ala_loss(l2.astype(jnp.bfloat16), y2, q2.astype(jnp.bfloat16), s=30.0))
    ref2 = _ala_loss_ref(l2.astype(jnp.bfloat16), y2, q2.astype(jnp.bfloat16), s=30.0)
    assert jnp.allclose(out_bf16, ref2, rtol=2e-2, atol=2e-2), (out_bf16, ref2)

    print("KERNEL_OK")
</pallas_src>

<mosaic_0001>
module attributes {stable_mosaic.version = 11 : i64} {
  func.func @_ala_loss_kernel(%arg0: i32, %arg1: memref<8x16xf32, #tpu.memory_space<vmem>>, %arg2: memref<8x1xi32, #tpu.memory_space<vmem>>, %arg3: memref<1x16xf32, #tpu.memory_space<vmem>>, %arg4: memref<1x1xf32, #tpu.memory_space<smem>>) attributes {dimension_semantics = [#tpu.dimension_semantics<parallel>], iteration_bounds = array<i64: 1>, scalar_prefetch = 0 : i64, scratch_operands = 0 : i64, tpu.core_type = #tpu.core_type<tc>, window_params = [{transform_indices = @transform_0, window_bounds = array<i64: 8, 16>}, {transform_indices = @transform_1, window_bounds = array<i64: 8, 1>}, {pipeline_mode = #tpu.pipeline_mode<synchronous>, transform_indices = @transform_2, window_bounds = array<i64: 1, 16>}, {transform_indices = @transform_3, window_bounds = array<i64: 1, 1>}]} {
    %c0 = arith.constant 0 : index
    %c0_0 = arith.constant 0 : index
    %0 = vector.load %arg1[%c0, %c0_0] : memref<8x16xf32, #tpu.memory_space<vmem>>, vector<8x16xf32>
    %c0_1 = arith.constant 0 : index
    %c0_2 = arith.constant 0 : index
    %1 = vector.load %arg2[%c0_1, %c0_2] : memref<8x1xi32, #tpu.memory_space<vmem>>, vector<8x1xi32>
    %c0_3 = arith.constant 0 : index
    %c0_4 = arith.constant 0 : index
    %2 = vector.load %arg3[%c0_3, %c0_4] : memref<1x16xf32, #tpu.memory_space<vmem>>, vector<1x16xf32>
    %c8_i32 = arith.constant 8 : i32
    %3 = arith.muli %arg0, %c8_i32 : i32
    %4 = tpu.iota {dimensions = array<i32: 0>} : vector<8x1xi32>
    %5 = vector.broadcast %3 : i32 to vector<8x1xi32>
    %6 = arith.addi %5, %4 : vector<8x1xi32>
    %c8_i32_5 = arith.constant 8 : i32
    %7 = vector.broadcast %c8_i32_5 : i32 to vector<8x1xi32>
    %8 = arith.cmpi slt, %6, %7 : vector<8x1xi32>
    %cst = arith.constant 0.000000e+00 : f32
    %9 = vector.shape_cast %8 : vector<8x1xi1> to vector<8x1xi1>
    %10 = vector.broadcast %9 : vector<8x1xi1> to vector<8x16xi1>
    %11 = vector.broadcast %cst : f32 to vector<8x16xf32>
    %12 = arith.select %10, %0, %11 : vector<8x16xi1>, vector<8x16xf32>
    %13 = tpu.iota {dimensions = array<i32: 1>} : vector<8x16xi32>
    %14 = vector.broadcast %1 : vector<8x1xi32> to vector<8x16xi32>
    %15 = arith.cmpi eq, %13, %14 : vector<8x16xi32>
    %16 = arith.extui %15 : vector<8x16xi1> to vector<8x16xi32>
    %17 = arith.sitofp %16 : vector<8x16xi32> to vector<8x16xf32>
    %cst_6 = arith.constant 3.000000e+01 : f32
    %18 = vector.broadcast %cst_6 : f32 to vector<8x16xf32>
    %19 = arith.mulf %18, %12 : vector<8x16xf32>
    %cst_7 = arith.constant 1.000000e+00 : f32
    %20 = vector.broadcast %cst_7 : f32 to vector<8x16xf32>
    %21 = arith.subf %20, %12 : vector<8x16xf32>
    %cst_8 = arith.constant 1.500000e+01 : f32
    %22 = vector.broadcast %cst_8 : f32 to vector<8x16xf32>
    %23 = arith.mulf %22, %21 : vector<8x16xf32>
    %24 = vector.broadcast %2 : vector<1x16xf32> to vector<8x16xf32>
    %25 = arith.mulf %23, %24 : vector<8x16xf32>
    %26 = arith.subf %19, %25 : vector<8x16xf32>
    %27 = arith.mulf %17, %26 : vector<8x16xf32>
    %cst_9 = arith.constant dense<0.000000e+00> : vector<8xf32>
    %28 = vector.multi_reduction <add>, %27, %cst_9 [1] : vector<8x16xf32> to vector<8xf32>
    %29 = vector.shape_cast %28 : vector<8xf32> to vector<8x1xf32>
    %cst_10 = arith.constant 3.000000e+01 : f32
    %30 = vector.broadcast %cst_10 : f32 to vector<8x16xf32>
    %31 = arith.mulf %30, %12 : vector<8x16xf32>
    %cst_11 = arith.constant dense<0xFF800000> : vector<8xf32>
    %32 = vector.multi_reduction <maximumf>, %31, %cst_11 [1] : vector<8x16xf32> to vector<8xf32>
    %33 = vector.shape_cast %32 : vector<8xf32> to vector<8x1xf32>
    %34 = vector.broadcast %33 : vector<8x1xf32> to vector<8x16xf32>
    %35 = arith.subf %31, %34 : vector<8x16xf32>
    %36 = math.exp %35 : vector<8x16xf32>
    %cst_12 = arith.constant dense<0.000000e+00> : vector<8xf32>
    %37 = vector.multi_reduction <add>, %36, %cst_12 [1] : vector<8x16xf32> to vector<8xf32>
    %38 = vector.shape_cast %37 : vector<8xf32> to vector<8x1xf32>
    %39 = math.log %38 : vector<8x1xf32>
    %40 = arith.addf %33, %39 : vector<8x1xf32>
    %41 = arith.subf %40, %29 : vector<8x1xf32>
    %cst_13 = arith.constant 0.000000e+00 : f32
    %42 = vector.broadcast %cst_13 : f32 to vector<8x1xf32>
    %43 = arith.select %8, %41, %42 : vector<8x1xi1>, vector<8x1xf32>
    %44 = vector.shape_cast %43 : vector<8x1xf32> to vector<1x8x1xf32>
    %cst_14 = arith.constant dense<0.000000e+00> : vector<1xf32>
    %45 = vector.multi_reduction <add>, %44, %cst_14 [1, 2] : vector<1x8x1xf32> to vector<1xf32>
    %46 = vector.shape_cast %45 : vector<1xf32> to vector<1x1x1xf32>
    %47 = vector.extract %46[0, 0, 0] : f32 from vector<1x1x1xf32>
    %c0_15 = arith.constant 0 : index
    %c0_16 = arith.constant 0 : index
    %48 = memref.load %arg4[%c0_15, %c0_16] : memref<1x1xf32, #tpu.memory_space<smem>>
    memref.store %47, %arg4[%c0_15, %c0_16] : memref<1x1xf32, #tpu.memory_space<smem>>
    return
  }
  func.func @transform_0(%arg0: i32) -> (i32, i32) {
    %c0_i32 = arith.constant 0 : i32
    %c0_i32_0 = arith.constant 0 : i32
    return %arg0, %c0_i32 : i32, i32
  }
  func.func @transform_1(%arg0: i32) -> (i32, i32) {
    %c0_i32 = arith.constant 0 : i32
    %c0_i32_0 = arith.constant 0 : i32
    return %arg0, %c0_i32 : i32, i32
  }
  func.func @transform_2(%arg0: i32) -> (i32, i32) {
    %c0_i32 = arith.constant 0 : i32
    %c0_i32_0 = arith.constant 0 : i32
    %c0_i32_1 = arith.constant 0 : i32
    return %c0_i32, %c0_i32_0 : i32, i32
  }
  func.func @transform_3(%arg0: i32) -> (i32, i32) {
    %c0_i32 = arith.constant 0 : i32
    %c0_i32_0 = arith.constant 0 : i32
    return %arg0, %c0_i32 : i32, i32
  }
}

</mosaic_0001>

<llo_original>
// kernel: tpu_custom_call.1
$region0: #{tpu_custom_call.1}
  #allocation0 [shape = 'u32[]', space=smem, size = 0x4, offset = 0x4, fixed_abs, tag = 'smem constant byte address 0x4 - core index']
  #allocation1 [shape = 'u32[144,128]{1,0:T(1,128)}', space=vmem, size = 0x12000, scoped, tag = 'internal scratch']
  %s0 = inlined_call_operand.vmem [shape: f32[8,16], index: 0, kind: input, shape index: {}]
  %s1 = inlined_call_operand.vmem [shape: s32[8,1], index: 1, kind: input, shape index: {}]
  %s2 = inlined_call_operand.vmem [shape: f32[1,16], index: 2, kind: input, shape index: {}]
  %s3 = inlined_call_operand.hbm [shape: f32[1,1], index: 3, kind: output, shape index: {}]
  %s4 = sld [smem:[#allocation0]]
  $region22: #{tpu_custom_call.1} parent=0
    _
  %s6 = ssub.s32 1, %s4
  %s7 = scalar_select 0, %s6, %s4
  $region1: #{tpu_custom_call.1} parent=0
    #allocation2 [shape = 'u8[512]{0}', space=smem, size = 0x200, scoped, tag = 'output window, operand 0, single buffered']
    #allocation3 [shape = 's32[1]{0}', space=sflag, size = 0x4, scoped, tag = 'scoped memory for tpu_custom_call.1']
    %8 = vsyncpa [#allocation3], 0
    // Predicated region
    $region2: #{tpu_custom_call.1} parent=1 // pred_check
      _
    $region3: #{tpu_custom_call.1} parent=1 // pred_check_branch
      %10 = sbr.rel (0) target = $region5
    $region4: #{tpu_custom_call.1} parent=1 // pred_region
      _
    $region5: #{tpu_custom_call.1} parent=1 // pred_fallthru
      _
    // Predicated region
    $region6: #{tpu_custom_call.1} parent=1 // pred_check
      _
    $region7: #{tpu_custom_call.1} parent=1 // pred_check_branch
      %12 = sbr.rel (0) target = $region9
    $region8: #{tpu_custom_call.1} parent=1 // pred_region
      _
    $region9: #{tpu_custom_call.1} parent=1 // pred_fallthru
      _
    // Predicated region
    $region10: #{tpu_custom_call.1} parent=1 // pred_check
      _
    $region11: #{tpu_custom_call.1} parent=1 // pred_check_branch
      %14 = sbr.rel (0) target = $region13
    $region12: #{tpu_custom_call.1} parent=1 // pred_region
      _
    $region13: #{tpu_custom_call.1} parent=1 // pred_fallthru
      _
    %v15 = vld [vmem:[%s0] sm:$0xff]
    %v16 = vld [vmem:[%s1] sm:$0xff]
    %v17 = vld [vmem:[%s2] sm:$0x1]
    %s18 = smul.u32 0, 8
    %v19 = vlaneseq
    %v20 = vshrl.u32 %v19, 7
    %v21 = vstv %s18
    %v22 = vadd.s32 %v21, %v20
    %vm23 = vcmp.lt.s32.totalorder %v22, 8
    %v24 = vsel %vm23, 1, 0
    %vm25 = vcmp.eq.s32.totalorder %v24, 1
    %v26 = vsel %vm25, %v15, 0.0
    %v27 = vlaneseq
    %v28 = vand.u32 %v27, 127
    %29 = vset.pattern.permute.xlu0 0
    %30 = vperm.xlu0 %29, %v16
    %v31 = vpop.permute.xlu0 %30
    %vm32 = vcmp.eq.s32.totalorder %v28, %v31
    %v33 = vsel %vm32, 1, 0
    %v34 = vcvt.s32.f32 %v33
    %v35 = vmul.f32 %v26, 30.0
    %v36 = vsub.f32 1.0, %v26
    %v37 = vmul.f32 %v36, 15.0
    %v39 = vlaneseq
    %v40 = vshrl.u32 %v39, 7
    %v41 = vsub.s32 0, %v40
    %v42 = vrot.slane %v17, %v41
    %v44 = vmul.f32 %v37, %v42
    %v45 = vsub.f32 %v35, %v44
    %v46 = vmul.f32 %v34, %v45
    %vm47 = vcmask 130048
    %v48 = vsel %vm47, %v46, 0.0
    %49 = vadd.xlane.f32.xlu0 %v48
    %v50 = vpop.xlane.xlu0 %49
    %v51 = vsel %vm47, %v35, -inf
    %52 = vmax.xlane.f32.xlu0 %v51
    %v53 = vpop.xlane.xlu0 %52
    %v54 = vsub.f32 %v35, %v53
    %v55 = vmul.f32 %v54, 1.442695
    %v56 = vpow.pop %v55
    %v57 = vsel %vm47, %v56, 0.0
    %58 = vadd.xlane.f32.xlu0 %v57
    %v59 = vpop.xlane.xlu0 %58
    %v60 = vlog2.pop %v59
    %v61 = vmul.f32 %v60, 0.6931472
    %v62 = vadd.f32 %v53, %v61
    %v63 = vsub.f32 %v62, %v50
    %v64 = vsel %vm23, %v63, 0.0
    %vm65 = vcmask 7168
    %v66 = vsel %vm65, %v64, 0.0
    %67 = vadd.xlane.f32.xlu0 %v66
    %v68 = vpop.xlane.xlu0 %67
    %v69 = vrot.slane %v68, 4
    %v70 = vadd.f32 %v68, %v69
    %v71 = vrot.slane %v70, 2
    %v72 = vadd.f32 %v70, %v71
    %v73 = vrot.slane %v72, 1
    %v74 = vadd.f32 %v72, %v73
    %s75 = vtos %v74
    %s76 = scalar_lea.smem [#allocation2], 0
    %77 = sst [smem:[%s76]] %s75
    // Predicated region
    $region14: #{tpu_custom_call.1} parent=1 // pred_check
      _
    $region15: #{tpu_custom_call.1} parent=1 // pred_check_branch
      %79 = sbr.rel (0) target = $region17
    $region16: #{tpu_custom_call.1} parent=1 // pred_region
      %s81 = ssub.s32 16, 16
      %82 = vsyncadd [#allocation3], %s81
      %85 = dma.smem_to_hbm [#allocation2], 16, %s3, [#allocation3]
    $region17: #{tpu_custom_call.1} parent=1 // pred_fallthru
      _
    // Predicated region
    $region18: #{tpu_custom_call.1} parent=1 // pred_check
      _
    $region19: #{tpu_custom_call.1} parent=1 // pred_check_branch
      %87 = sbr.rel (0) target = $region21
    $region20: #{tpu_custom_call.1} parent=1 // pred_region
      %88 = dma.done [#allocation3], 16
    $region21: #{tpu_custom_call.1} parent=1 // pred_fallthru
      _
    %89 = sfence
    %90 = vsyncpa [#allocation3], 1

</llo_original>
